<compile_context>
chip_gen: v6e
topology: v6e:2x2x1
jax: 0.10.0
libtpu: 0.0.40
codegen_flags: <defaults>
</compile_context>

<pallas_src>
import jax
import jax.numpy as jnp
import numpy as np
from jax.experimental import pallas as pl
from jax.experimental.pallas import tpu as pltpu

# Module constants from the PyTorch spec.
DIM_LIST = [64, 256, 512, 1024, 2048]       # backbone stage channels
OUT_DIM_LIST = [64, 128, 256, 512, 1024]    # conversion head output channels
BN_EPS = 1e-5


# ----------------------------------------------------------------------------
# Fused BN(eval) -> ReLU -> 1x1 conv (no bias) Pallas kernel
# ----------------------------------------------------------------------------
def _convert_head_kernel(x_ref, scale_ref, shift_ref, w_ref, o_ref):
    """One (batch, HW-tile) grid step.

    x_ref:     (1, Cin,  THW)  stage feature slab (lane axis = THW)
    scale_ref: (1, Cin,  1)    folded BN scale  = gamma / sqrt(var + eps)   (f32)
    shift_ref: (1, Cin,  1)    folded BN shift  = beta - mean * scale       (f32)
    w_ref:     (Cout, Cin)     1x1 conv weight (same dtype as x)
    o_ref:     (1, Cout, THW)  converted feature slab
    """
    x = x_ref[0]                                            # (Cin, THW)
    # BN(eval) affine + ReLU on the VPU (computed in f32 via broadcast).
    a = jnp.maximum(x * scale_ref[0] + shift_ref[0], 0.0)
    # 1x1 conv == matmul on the MXU, f32 accumulation.
    o_ref[0] = jnp.dot(w_ref[...], a.astype(w_ref.dtype),
                       preferred_element_type=jnp.float32).astype(o_ref.dtype)


def _pick_hw_tile(HW, Cin, Cout, itemsize, target_bytes=2 << 20):
    """Largest multiple-of-128 divisor of HW keeping x+out blocks ~target_bytes.

    Falls back to the full HW extent when HW is not lane-aligned (full-extent
    blocks are always legal)."""
    if HW % 128 != 0:
        return HW
    per_lane = (Cin + Cout) * itemsize
    t = max(128, (target_bytes // max(1, per_lane)) // 128 * 128)
    t = min(t, HW)
    while HW % t != 0:
        t -= 128
    return max(t, 128)


def convert_head(x, gamma, beta, mean, var, w, *, eps=BN_EPS, hw_tile=None):
    """myConv(norm='BN', act='ReLU', kSize=1, bias=False) forward, fused.

    x: (N, Cin, H, W) feature.  w: (Cout, Cin) 1x1 conv weight.
    gamma/beta/mean/var: BatchNorm2d affine + running stats (eval mode).
    Returns (N, Cout, H, W) in x.dtype.
    """
    N, Cin, H, W = x.shape
    Cout = w.shape[0]
    HW = H * W

    # Fold the eval-mode BN into a per-channel affine (f32 for accuracy).
    inv = 1.0 / jnp.sqrt(var.astype(jnp.float32) + eps)
    scale = (gamma.astype(jnp.float32) * inv).reshape(1, Cin, 1)
    shift = (beta.astype(jnp.float32)
             - mean.astype(jnp.float32) * gamma.astype(jnp.float32) * inv
             ).reshape(1, Cin, 1)

    # Lane-dense layout: (N, Cin, H, W) -> (N, Cin, H*W)  (free reshape).
    x2 = x.reshape(N, Cin, HW)
    w2 = w.reshape(Cout, Cin).astype(x.dtype)

    itemsize = jnp.dtype(x.dtype).itemsize
    THW = hw_tile if hw_tile is not None else _pick_hw_tile(HW, Cin, Cout, itemsize)
    grid = (N, HW // THW)

    # Working set: double-buffered x/out blocks + resident scale/shift/weight.
    blk_bytes = (2 * (Cin + Cout) * THW * itemsize
                 + 2 * (2 * Cin * 4)
                 + 2 * Cout * Cin * itemsize)
    vmem_limit = int(min(48 << 20, max(16 << 20, blk_bytes + (4 << 20))))

    out = pl.pallas_call(
        _convert_head_kernel,
        out_shape=jax.ShapeDtypeStruct((N, Cout, HW), x.dtype),
        grid_spec=pltpu.PrefetchScalarGridSpec(
            num_scalar_prefetch=0,
            grid=grid,
            in_specs=[
                pl.BlockSpec((1, Cin, THW), lambda n, h: (n, 0, h)),
                pl.BlockSpec((1, Cin, 1), lambda n, h: (0, 0, 0)),
                pl.BlockSpec((1, Cin, 1), lambda n, h: (0, 0, 0)),
                pl.BlockSpec((Cout, Cin), lambda n, h: (0, 0)),
            ],
            out_specs=pl.BlockSpec((1, Cout, THW), lambda n, h: (n, 0, h)),
        ),
        compiler_params=pltpu.CompilerParams(
            dimension_semantics=("parallel", "parallel"),
            vmem_limit_bytes=vmem_limit),
    )(x2, scale, shift, w2)
    return out.reshape(N, Cout, H, W)


def _convert_head_reference(x, gamma, beta, mean, var, w, eps=BN_EPS):
    """Pure-JAX reference of the torch myConv forward (eval-mode BN)."""
    x32 = x.astype(jnp.float32)
    inv = 1.0 / jnp.sqrt(var + eps)
    xn = (x32 - mean[None, :, None, None]) * inv[None, :, None, None]
    a = jnp.maximum(xn * gamma[None, :, None, None] + beta[None, :, None, None], 0.0)
    return jnp.einsum('oc,nchw->nohw', w, a,
                      precision=jax.lax.Precision.HIGHEST)


# ----------------------------------------------------------------------------
# ResNet50_KD conversion-head stack (the module's own parameters / forward tail)
# ----------------------------------------------------------------------------
def init_resnet50_kd_convert_params(key, dtype=jnp.float32):
    """Deterministic stand-in parameters for the 5 myConv conversion heads."""
    params = []
    for cin, cout in zip(DIM_LIST, OUT_DIM_LIST):
        key, kg, kb, km, kv, kw = jax.random.split(key, 6)
        params.append(dict(
            gamma=jax.random.uniform(kg, (cin,), minval=0.5, maxval=1.5),
            beta=jax.random.normal(kb, (cin,)) * 0.1,
            mean=jax.random.normal(km, (cin,)) * 0.1,
            var=jax.random.uniform(kv, (cin,), minval=0.5, maxval=1.5),
            w=(jax.random.normal(kw, (cout, cin)) / np.sqrt(cin)).astype(dtype),
        ))
    return params


def resnet50_kd_convert_forward(stage_features, params):
    """ResNet50_KD.forward tail: for each backbone stage feature ('relu',
    'layer1'..'layer4') apply its conversion head and return out_featList.

    # TODO(synk): the pretrained resnet50 encoder itself is not reproducible
    # in-script; its per-stage outputs are supplied as `stage_features`.
    """
    return [convert_head(f, p['gamma'], p['beta'], p['mean'], p['var'], p['w'])
            for f, p in zip(stage_features, params)]


# ----------------------------------------------------------------------------
if __name__ == "__main__":
    key = jax.random.PRNGKey(0)
    N = 2
    # Scaled-down stage spatial sizes (real model: 112, 56, 28, 14, 7).
    SPATIAL = [16, 16, 8, 8, 4]

    kp, kf = jax.random.split(key)
    params = init_resnet50_kd_convert_params(kp)

    feats = []
    fk = kf
    for cin, s in zip(DIM_LIST, SPATIAL):
        fk, sub = jax.random.split(fk)
        feats.append(jax.random.normal(sub, (N, cin, s, s), dtype=jnp.float32))

    # ---- full forward tail (all 5 conversion heads as Pallas kernels) -------
    outs = resnet50_kd_convert_forward(feats, params)
    jax.block_until_ready(outs)

    for f, p, o, cout in zip(feats, params, outs, OUT_DIM_LIST):
        assert o.shape == (N, cout, f.shape[2], f.shape[3]), o.shape
        ref = _convert_head_reference(f, p['gamma'], p['beta'], p['mean'],
                                      p['var'], p['w'])
        np.testing.assert_allclose(np.asarray(o), np.asarray(ref),
                                   rtol=1e-2, atol=1e-2)

    # ---- bf16 fast path (halves HBM traffic; f32 MXU accumulation) ----------
    p0 = params[0]
    x_bf = feats[0].astype(jnp.bfloat16)
    y_bf = convert_head(x_bf, p0['gamma'], p0['beta'], p0['mean'], p0['var'],
                        p0['w'].astype(jnp.bfloat16))
    jax.block_until_ready(y_bf)
    ref0 = _convert_head_reference(feats[0], p0['gamma'], p0['beta'], p0['mean'],
                                   p0['var'], p0['w'])
    np.testing.assert_allclose(np.asarray(y_bf.astype(jnp.float32)),
                               np.asarray(ref0), rtol=6e-2, atol=6e-2)

    # ---- explicit HW-tiling path (grid splits the lane axis) ----------------
    y_tiled = convert_head(feats[0], p0['gamma'], p0['beta'], p0['mean'],
                           p0['var'], p0['w'], hw_tile=128)
    jax.block_until_ready(y_tiled)
    np.testing.assert_allclose(np.asarray(y_tiled), np.asarray(ref0),
                               rtol=1e-2, atol=1e-2)

    print("KERNEL_OK")
</pallas_src>

<mosaic_0001>
module attributes {stable_mosaic.version = 11 : i64} {
  func.func @_convert_head_kernel(%arg0: i32, %arg1: i32, %arg2: memref<1x64x256xf32, #tpu.memory_space<vmem>>, %arg3: memref<1x64x1xf32, #tpu.memory_space<vmem>>, %arg4: memref<1x64x1xf32, #tpu.memory_space<vmem>>, %arg5: memref<64x64xf32, #tpu.memory_space<vmem>>, %arg6: memref<1x64x256xf32, #tpu.memory_space<vmem>>) attributes {dimension_semantics = [#tpu.dimension_semantics<parallel>, #tpu.dimension_semantics<parallel>], iteration_bounds = array<i64: 2, 1>, scalar_prefetch = 0 : i64, scratch_operands = 0 : i64, tpu.core_type = #tpu.core_type<tc>, window_params = [{transform_indices = @transform_0, window_bounds = array<i64: 1, 64, 256>}, {pipeline_mode = #tpu.pipeline_mode<synchronous>, transform_indices = @transform_1, window_bounds = array<i64: 1, 64, 1>}, {pipeline_mode = #tpu.pipeline_mode<synchronous>, transform_indices = @transform_2, window_bounds = array<i64: 1, 64, 1>}, {pipeline_mode = #tpu.pipeline_mode<synchronous>, transform_indices = @transform_3, window_bounds = array<i64: 64, 64>}, {transform_indices = @transform_4, window_bounds = array<i64: 1, 64, 256>}]} {
    %c0 = arith.constant 0 : index
    %c0_0 = arith.constant 0 : index
    %c0_1 = arith.constant 0 : index
    %0 = vector.load %arg2[%c0, %c0_0, %c0_1] : memref<1x64x256xf32, #tpu.memory_space<vmem>>, vector<1x64x256xf32>
    %1 = vector.shape_cast %0 : vector<1x64x256xf32> to vector<64x256xf32>
    %c0_2 = arith.constant 0 : index
    %c0_3 = arith.constant 0 : index
    %c0_4 = arith.constant 0 : index
    %2 = vector.load %arg3[%c0_2, %c0_3, %c0_4] : memref<1x64x1xf32, #tpu.memory_space<vmem>>, vector<1x64x1xf32>
    %3 = vector.shape_cast %2 : vector<1x64x1xf32> to vector<64x1xf32>
    %4 = vector.broadcast %3 : vector<64x1xf32> to vector<64x256xf32>
    %5 = arith.mulf %1, %4 : vector<64x256xf32>
    %c0_5 = arith.constant 0 : index
    %c0_6 = arith.constant 0 : index
    %c0_7 = arith.constant 0 : index
    %6 = vector.load %arg4[%c0_5, %c0_6, %c0_7] : memref<1x64x1xf32, #tpu.memory_space<vmem>>, vector<1x64x1xf32>
    %7 = vector.shape_cast %6 : vector<1x64x1xf32> to vector<64x1xf32>
    %8 = vector.broadcast %7 : vector<64x1xf32> to vector<64x256xf32>
    %9 = arith.addf %5, %8 : vector<64x256xf32>
    %cst = arith.constant 0.000000e+00 : f32
    %10 = vector.broadcast %cst : f32 to vector<64x256xf32>
    %11 = arith.maximumf %9, %10 : vector<64x256xf32>
    %c0_8 = arith.constant 0 : index
    %c0_9 = arith.constant 0 : index
    %12 = vector.load %arg5[%c0_8, %c0_9] : memref<64x64xf32, #tpu.memory_space<vmem>>, vector<64x64xf32>
    %cst_10 = arith.constant dense<0.000000e+00> : vector<64x256xf32>
    %13 = tpu.matmul %12, %11, %cst_10 {dimension_numbers = #tpu.dot_dimension_numbers<[1], [0], [0], [1], [0, 0, 1, 1], [], []>} : vector<64x64xf32>, vector<64x256xf32>, vector<64x256xf32> -> vector<64x256xf32>
    %c0_11 = arith.constant 0 : index
    %c0_12 = arith.constant 0 : index
    %c0_13 = arith.constant 0 : index
    %14 = vector.load %arg6[%c0_11, %c0_12, %c0_13] : memref<1x64x256xf32, #tpu.memory_space<vmem>>, vector<1x64x256xf32>
    %15 = vector.shape_cast %14 : vector<1x64x256xf32> to vector<64x256xf32>
    %16 = vector.shape_cast %13 : vector<64x256xf32> to vector<1x64x256xf32>
    tpu.vector_store %arg6[%c0_11, %c0_12, %c0_13], %16 {strides = array<i32>} : memref<1x64x256xf32, #tpu.memory_space<vmem>>, vector<1x64x256xf32>,
    return
  }
  func.func @transform_0(%arg0: i32, %arg1: i32) -> (i32, i32, i32) {
    %c0_i32 = arith.constant 0 : i32
    %c0_i32_0 = arith.constant 0 : i32
    return %arg0, %c0_i32, %arg1 : i32, i32, i32
  }
  func.func @transform_1(%arg0: i32, %arg1: i32) -> (i32, i32, i32) {
    %c0_i32 = arith.constant 0 : i32
    %c0_i32_0 = arith.constant 0 : i32
    %c0_i32_1 = arith.constant 0 : i32
    %c0_i32_2 = arith.constant 0 : i32
    return %c0_i32, %c0_i32_0, %c0_i32_1 : i32, i32, i32
  }
  func.func @transform_2(%arg0: i32, %arg1: i32) -> (i32, i32, i32) {
    %c0_i32 = arith.constant 0 : i32
    %c0_i32_0 = arith.constant 0 : i32
    %c0_i32_1 = arith.constant 0 : i32
    %c0_i32_2 = arith.constant 0 : i32
    return %c0_i32, %c0_i32_0, %c0_i32_1 : i32, i32, i32
  }
  func.func @transform_3(%arg0: i32, %arg1: i32) -> (i32, i32) {
    %c0_i32 = arith.constant 0 : i32
    %c0_i32_0 = arith.constant 0 : i32
    %c0_i32_1 = arith.constant 0 : i32
    return %c0_i32, %c0_i32_0 : i32, i32
  }
  func.func @transform_4(%arg0: i32, %arg1: i32) -> (i32, i32, i32) {
    %c0_i32 = arith.constant 0 : i32
    %c0_i32_0 = arith.constant 0 : i32
    return %arg0, %c0_i32, %arg1 : i32, i32, i32
  }
}

</mosaic_0001>

<llo_original>
// kernel: tpu_custom_call.1
$region0: #{tpu_custom_call.1}
  #allocation0 [shape = 'u32[]', space=smem, size = 0x4, offset = 0x4, fixed_abs, tag = 'smem constant byte address 0x4 - core index']
  #allocation1 [shape = 'u32[144,128]{1,0:T(1,128)}', space=vmem, size = 0x12000, scoped, tag = 'internal scratch']
  %s0 = inlined_call_operand.hbm [shape: f32[2,64,256], index: 0, kind: input, shape index: {}]
  %s1 = inlined_call_operand.vmem [shape: f32[1,64,1], index: 1, kind: input, shape index: {}]
  %s2 = inlined_call_operand.vmem [shape: f32[1,64,1], index: 2, kind: input, shape index: {}]
  %s3 = inlined_call_operand.vmem [shape: f32[64,64], index: 3, kind: input, shape index: {}]
  %s4 = inlined_call_operand.hbm [shape: f32[2,64,256], index: 4, kind: output, shape index: {}]
  %s5 = sld [smem:[#allocation0]]
  $region53: #{tpu_custom_call.1} parent=0
    _
  %s7 = ssub.s32 1, %s5
  %s8 = scalar_select 0, %s7, %s5
  $region1: #{tpu_custom_call.1} parent=0
    #allocation2 [shape = 'u8[131072]{0}', space=vmem, size = 0x20000, scoped, tag = 'input window, operand 0']
    #allocation3 [shape = 's32[2]{0}', space=sflag, size = 0x8, scoped, tag = 'scoped memory for tpu_custom_call.1']
    #allocation4 [shape = 's32[2]{0}', space=sflag, size = 0x8, scoped, tag = 'scoped memory for tpu_custom_call.1']
    #allocation5 [shape = 'u8[131072]{0}', space=vmem, size = 0x20000, scoped, tag = 'output window, operand 0']
    %9 = vsyncpa [#allocation3], 0
    %s10 = scalar_lea.sflag [#allocation3], 1
    %11 = vsyncpa %s10, 0
    %12 = vsyncpa [#allocation4], 0
    %s13 = scalar_lea.sflag [#allocation4], 1
    %14 = vsyncpa %s13, 0
    loop: start=0, step=1, limit=4
    $region2: #{tpu_custom_call.1} parent=1 // loop_pre_header
      _
    $region3: #{tpu_custom_call.1} parent=1 // loop_header
      %s16 = sphi 0, %s20
      %p17 = scmp.ge.s32.totalorder %s16, 4
      %s23 = sphi 0, %s35
      %s24 = sphi 0, %s31
      %s25 = sphi 0, %s23
      %s26 = sphi 0, %s24
      %s27 = sphi 0, %s25
      %s28 = sphi 0, %s26
      %s40 = sphi 0, %s42
      %s43 = sphi 0, %s40
      %s44 = sphi 0, %s43
      %s60 = sphi 0, %s44
      %s64 = sphi 0, %s64
      %s66 = sphi 0, %s64
      %s67 = sphi 0, %s66
      %s81 = sphi 0, %s67
      %s85 = sphi 0, %s85
      %s87 = sphi 0, %s85
      %s88 = sphi 0, %s87
      %s102 = sphi 0, %s88
      %s106 = sphi 0, %s106
      %s108 = sphi 0, %s106
      %s109 = sphi 0, %s108
      %s123 = sphi 0, %s109
      %s131 = sphi 0, %s133
      %s134 = sphi 0, %s131
      %s135 = sphi 0, %s134
      %s151 = sphi 0, %s135
    $region4: #{tpu_custom_call.1} parent=1 // loop_header_branch
      %19 = sbr.rel (%p17) target = $region8
    $region5: #{tpu_custom_call.1} parent=1 // loop_body
      %s21 = ssub.s32 %s16, 1
      %s22 = ssub.s32 %s16, 2
      %s29 = sadd.s32 1, %s24
      %p30 = scmp.ge.s32.totalorder %s29, 1
      %s31 = scalar_select %p30, 0, %s29
      %s32 = sadd.s32 1, %s23
      %s33 = scalar_select %p30, %s32, %s23
      %p34 = scmp.ge.s32.totalorder %s33, 2
      %s35 = scalar_select %p34, 0, %s33
      %s36 = ssub.s32 %s23, %s35
      %s37 = ssub.s32 %s24, %s31
      %s38 = sor.u32 %s36, %s37
      %p39 = scmp.eq.s32.totalorder %s38, 0
      %s41 = sadd.s32 %s40, 1
      %s42 = scalar_select %p39, %s40, %s41
      %p45 = pneg %p39
      %p46 = scmp.eq.s32.totalorder %s16, 1
      %p47 = por %p45, %p46
      %p48 = scmp.ne.s32.totalorder %s40, %s43
      %p49 = scmp.eq.s32.totalorder %s16, 0
      %p50 = por %p48, %p49
      %p51 = scmp.ne.s32.totalorder %s40, %s43
      %p52 = scmp.eq.s32.totalorder %s21, 1
      %p53 = por %p51, %p52
      %p54 = scmp.ne.s32.totalorder %s43, %s44
      %p55 = scmp.eq.s32.totalorder %s21, 0
      %p56 = por %p54, %p55
      %p57 = scmp.ne.s32.totalorder %s43, %s44
      %p58 = scmp.eq.s32.totalorder %s22, 1
      %p59 = por %p57, %p58
      %p61 = scmp.ne.s32.totalorder %s44, %s60
      %p62 = scmp.eq.s32.totalorder %s22, 0
      %p63 = por %p61, %p62
      %s65 = sadd.s32 %s64, 1
      %p68 = scmp.eq.s32.totalorder %s16, 1
      %p69 = scmp.ne.s32.totalorder %s64, %s66
      %p70 = scmp.eq.s32.totalorder %s16, 0
      %p71 = por %p69, %p70
      %p72 = scmp.ne.s32.totalorder %s64, %s66
      %p73 = scmp.eq.s32.totalorder %s21, 1
      %p74 = por %p72, %p73
      %p75 = scmp.ne.s32.totalorder %s66, %s67
      %p76 = scmp.eq.s32.totalorder %s21, 0
      %p77 = por %p75, %p76
      %p78 = scmp.ne.s32.totalorder %s66, %s67
      %p79 = scmp.eq.s32.totalorder %s22, 1
      %p80 = por %p78, %p79
      %p82 = scmp.ne.s32.totalorder %s67, %s81
      %p83 = scmp.eq.s32.totalorder %s22, 0
      %p84 = por %p82, %p83
      %s86 = sadd.s32 %s85, 1
      %p89 = scmp.eq.s32.totalorder %s16, 1
      %p90 = scmp.ne.s32.totalorder %s85, %s87
      %p91 = scmp.eq.s32.totalorder %s16, 0
      %p92 = por %p90, %p91
      %p93 = scmp.ne.s32.totalorder %s85, %s87
      %p94 = scmp.eq.s32.totalorder %s21, 1
      %p95 = por %p93, %p94
      %p96 = scmp.ne.s32.totalorder %s87, %s88
      %p97 = scmp.eq.s32.totalorder %s21, 0
      %p98 = por %p96, %p97
      %p99 = scmp.ne.s32.totalorder %s87, %s88
      %p100 = scmp.eq.s32.totalorder %s22, 1
      %p101 = por %p99, %p100
      %p103 = scmp.ne.s32.totalorder %s88, %s102
      %p104 = scmp.eq.s32.totalorder %s22, 0
      %p105 = por %p103, %p104
      %s107 = sadd.s32 %s106, 1
      %p110 = scmp.eq.s32.totalorder %s16, 1
      %p111 = scmp.ne.s32.totalorder %s106, %s108
      %p112 = scmp.eq.s32.totalorder %s16, 0
      %p113 = por %p111, %p112
      %p114 = scmp.ne.s32.totalorder %s106, %s108
      %p115 = scmp.eq.s32.totalorder %s21, 1
      %p116 = por %p114, %p115
      %p117 = scmp.ne.s32.totalorder %s108, %s109
      %p118 = scmp.eq.s32.totalorder %s21, 0
      %p119 = por %p117, %p118
      %p120 = scmp.ne.s32.totalorder %s108, %s109
      %p121 = scmp.eq.s32.totalorder %s22, 1
      %p122 = por %p120, %p121
      %p124 = scmp.ne.s32.totalorder %s109, %s123
      %p125 = scmp.eq.s32.totalorder %s22, 0
      %p126 = por %p124, %p125
      %s127 = ssub.s32 %s23, %s35
      %s128 = ssub.s32 %s24, %s31
      %s129 = sor.u32 %s127, %s128
      %p130 = scmp.eq.s32.totalorder %s129, 0
      %s132 = sadd.s32 %s131, 1
      %s133 = scalar_select %p130, %s131, %s132
      %p136 = pneg %p130
      %p137 = scmp.eq.s32.totalorder %s16, 1
      %p138 = por %p136, %p137
      %p139 = scmp.ne.s32.totalorder %s131, %s134
      %p140 = scmp.eq.s32.totalorder %s16, 0
      %p141 = por %p139, %p140
      %p142 = scmp.ne.s32.totalorder %s131, %s134
      %p143 = scmp.eq.s32.totalorder %s21, 1
      %p144 = por %p142, %p143
      %p145 = scmp.ne.s32.totalorder %s134, %s135
      %p146 = scmp.eq.s32.totalorder %s21, 0
      %p147 = por %p145, %p146
      %p148 = scmp.ne.s32.totalorder %s134, %s135
      %p149 = scmp.eq.s32.totalorder %s22, 1
      %p150 = por %p148, %p149
      %p152 = scmp.ne.s32.totalorder %s135, %s151
      %p153 = scmp.eq.s32.totalorder %s22, 0
      %p154 = por %p152, %p153
      %p155 = scmp.le.s32.totalorder 1, %s16
      %p156 = scmp.lt.s32.totalorder %s16, 3
      %p157 = pnand %p155, %p156
      %p158 = pneg %p157
      // Predicated region
      $region9: #{tpu_custom_call.1} parent=5 // pred_check
        _
      $region10: #{tpu_custom_call.1} parent=5 // pred_check_branch
        %160 = sbr.rel (%p157) target = $region12
      $region11: #{tpu_custom_call.1} parent=5 // pred_region
        %s161 = ssub.s32 %s16, 1
        // Predicated region
        $region13: #{tpu_custom_call.1} parent=11 // pred_check
          %p162 = pneg %p77
        $region14: #{tpu_custom_call.1} parent=11 // pred_check_branch
          %164 = sbr.rel (%p162) target = $region16
        $region15: #{tpu_custom_call.1} parent=11 // pred_region
          _
        $region16: #{tpu_custom_call.1} parent=11 // pred_fallthru
          _
        // Predicated region
        $region17: #{tpu_custom_call.1} parent=11 // pred_check
          %p165 = pneg %p98
        $region18: #{tpu_custom_call.1} parent=11 // pred_check_branch
          %167 = sbr.rel (%p165) target = $region20
        $region19: #{tpu_custom_call.1} parent=11 // pred_region
          _
        $region20: #{tpu_custom_call.1} parent=11 // pred_fallthru
          _
        // Predicated region
        $region21: #{tpu_custom_call.1} parent=11 // pred_check
          %p168 = pneg %p119
        $region22: #{tpu_custom_call.1} parent=11 // pred_check_branch
          %170 = sbr.rel (%p168) target = $region24
        $region23: #{tpu_custom_call.1} parent=11 // pred_region
          _
        $region24: #{tpu_custom_call.1} parent=11 // pred_fallthru
          _
      $region12: #{tpu_custom_call.1} parent=5 // pred_fallthru
        _
      %p171 = scmp.lt.s32.totalorder %s16, 2
      // Predicated region
      $region25: #{tpu_custom_call.1} parent=5 // pred_check
        %p172 = pneg %p171
      $region26: #{tpu_custom_call.1} parent=5 // pred_check_branch
        %174 = sbr.rel (%p172) target = $region28
      $region27: #{tpu_custom_call.1} parent=5 // pred_region
        // Predicated region
        $region29: #{tpu_custom_call.1} parent=27 // pred_check
          %p175 = pneg %p50
        $region30: #{tpu_custom_call.1} parent=27 // pred_check_branch
          %177 = sbr.rel (%p175) target = $region32
        $region31: #{tpu_custom_call.1} parent=27 // pred_region
          %s178 = sand.u32 %s40, 1
          %s179 = scalar_lea.sflag [#allocation3], %s178
          %s180 = sand.u32 %s40, 1
          %s181 = smul.addr %s180, 128
          %s182 = scalar_lea.vmem [#allocation2], %s181
          %s183 = smul.u32 2, %s24
          %s185 = ssub.s32 2048, 2048
          %186 = vsyncadd %s179, %s185
          %s187 = smul.addr %s23, 16
          %s188 = sadd.s32 %s183, %s187
          %s189 = smul.addr %s188, 128
          %s190 = scalar_lea.hbm %s0, %s189
          %s191 = sshll.u32 %s182, 4
          %s192 = int_to_ptr.vmem [resolvable:$true] %s191
          %197 = dma.hbm_to_vmem [thread:$0]  %s190, 2048, %s192, %s179, 256, 256, 16
        $region32: #{tpu_custom_call.1} parent=27 // pred_fallthru
          _
      $region28: #{tpu_custom_call.1} parent=5 // pred_fallthru
        _
      %p198 = scmp.le.s32.totalorder 1, %s16
      %p199 = scmp.lt.s32.totalorder %s16, 3
      %p200 = pnand %p198, %p199
      %p201 = pneg %p200
      // Predicated region
      $region33: #{tpu_custom_call.1} parent=5 // pred_check
        _
      $region34: #{tpu_custom_call.1} parent=5 // pred_check_branch
        %203 = sbr.rel (%p200) target = $region36
      $region35: #{tpu_custom_call.1} parent=5 // pred_region
        %s204 = ssub.s32 %s16, 1
        %s205 = sand.u32 %s43, 1
        %s206 = scalar_lea.sflag [#allocation3], %s205
        %s207 = sand.u32 %s43, 1
        %s208 = smul.addr %s207, 128
        %s209 = scalar_lea.vmem [#allocation2], %s208
        // Predicated region
        $region37: #{tpu_custom_call.1} parent=35 // pred_check
          %p210 = pneg %p56
        $region38: #{tpu_custom_call.1} parent=35 // pred_check_branch
          %212 = sbr.rel (%p210) target = $region40
        $region39: #{tpu_custom_call.1} parent=35 // pred_region
          %213 = dma.done %s206, 2048
        $region40: #{tpu_custom_call.1} parent=35 // pred_fallthru
          _
        %s214 = sand.u32 %s43, 1
        %s215 = scalar_lea.sflag [#allocation3], %s214
        %s216 = sand.u32 %s43, 1
        %s217 = smul.addr %s216, 128
        %s218 = scalar_lea.vmem [#allocation2], %s217
        %p219 = pneg %p56
        %p220 = pneg %p53
        %p221 = pneg %p77
        %p222 = pneg %p74
        %p223 = pneg %p98
        %p224 = pneg %p95
        %p225 = pneg %p119
        %p226 = pneg %p116
        %p227 = pneg %p147
        %p228 = pneg %p144
        %s229 = sand.u32 %s134, 1
        %s230 = scalar_lea.sflag [#allocation4], %s229
        %s231 = sand.u32 %s134, 1
        %s232 = smul.addr %s231, 128
        %s233 = scalar_lea.vmem [#allocation5], %s232
        %s234 = smul.u32 2, %s26
        %s235 = smul.u32 2, %s26
        %v236 = vld [vmem:[%s209] sm:$0xff]
        %v237 = vld [vmem:[%s209 + $0x8] sm:$0xff]
        %v238 = vld [vmem:[%s209 + $0x10] sm:$0xff]
        %v239 = vld [vmem:[%s209 + $0x18] sm:$0xff]
        %v240 = vld [vmem:[%s209 + $0x20] sm:$0xff]
        %v241 = vld [vmem:[%s209 + $0x28] sm:$0xff]
        %v242 = vld [vmem:[%s209 + $0x30] sm:$0xff]
        %v243 = vld [vmem:[%s209 + $0x38] sm:$0xff]
        %v244 = vld [vmem:[%s209 + $0x40] sm:$0xff]
        %v245 = vld [vmem:[%s209 + $0x48] sm:$0xff]
        %v246 = vld [vmem:[%s209 + $0x50] sm:$0xff]
        %v247 = vld [vmem:[%s209 + $0x58] sm:$0xff]
        %v248 = vld [vmem:[%s209 + $0x60] sm:$0xff]
        %v249 = vld [vmem:[%s209 + $0x68] sm:$0xff]
        %v250 = vld [vmem:[%s209 + $0x70] sm:$0xff]
        %v251 = vld [vmem:[%s209 + $0x78] sm:$0xff]
        %v252 = vld [vmem:[%s1] sm:$0xff]
        %v253 = vld [vmem:[%s1 + $0x8] sm:$0xff]
        %v254 = vld [vmem:[%s1 + $0x10] sm:$0xff]
        %v255 = vld [vmem:[%s1 + $0x18] sm:$0xff]
        %v256 = vld [vmem:[%s1 + $0x20] sm:$0xff]
        %v257 = vld [vmem:[%s1 + $0x28] sm:$0xff]
        %v258 = vld [vmem:[%s1 + $0x30] sm:$0xff]
        %v259 = vld [vmem:[%s1 + $0x38] sm:$0xff]
        %261 = vset.pattern.permute.xlu0 0
        %262 = vperm.xlu0 %261, %v252
        %v263 = vpop.permute.xlu0 %262
        %266 = vset.pattern.permute.xlu0 0
        %267 = vperm.xlu0 %266, %v253
        %v268 = vpop.permute.xlu0 %267
        %271 = vset.pattern.permute.xlu0 0
        %272 = vperm.xlu0 %271, %v254
        %v273 = vpop.permute.xlu0 %272
        %276 = vset.pattern.permute.xlu0 0
        %277 = vperm.xlu0 %276, %v255
        %v278 = vpop.permute.xlu0 %277
        %281 = vset.pattern.permute.xlu0 0
        %282 = vperm.xlu0 %281, %v256
        %v283 = vpop.permute.xlu0 %282
        %286 = vset.pattern.permute.xlu0 0
        %287 = vperm.xlu0 %286, %v257
        %v288 = vpop.permute.xlu0 %287
        %291 = vset.pattern.permute.xlu0 0
        %292 = vperm.xlu0 %291, %v258
        %v293 = vpop.permute.xlu0 %292
        %296 = vset.pattern.permute.xlu0 0
        %297 = vperm.xlu0 %296, %v259
        %v298 = vpop.permute.xlu0 %297
        %v300 = vmul.f32 %v236, %v263
        %v301 = vmul.f32 %v237, %v263
        %v302 = vmul.f32 %v238, %v268
        %v303 = vmul.f32 %v239, %v268
        %v304 = vmul.f32 %v240, %v273
        %v305 = vmul.f32 %v241, %v273
        %v306 = vmul.f32 %v242, %v278
        %v307 = vmul.f32 %v243, %v278
        %v308 = vmul.f32 %v244, %v283
        %v309 = vmul.f32 %v245, %v283
        %v310 = vmul.f32 %v246, %v288
        %v311 = vmul.f32 %v247, %v288
        %v312 = vmul.f32 %v248, %v293
        %v313 = vmul.f32 %v249, %v293
        %v314 = vmul.f32 %v250, %v298
        %v315 = vmul.f32 %v251, %v298
        %v316 = vld [vmem:[%s2] sm:$0xff]
        %v317 = vld [vmem:[%s2 + $0x8] sm:$0xff]
        %v318 = vld [vmem:[%s2 + $0x10] sm:$0xff]
        %v319 = vld [vmem:[%s2 + $0x18] sm:$0xff]
        %v320 = vld [vmem:[%s2 + $0x20] sm:$0xff]
        %v321 = vld [vmem:[%s2 + $0x28] sm:$0xff]
        %v322 = vld [vmem:[%s2 + $0x30] sm:$0xff]
        %v323 = vld [vmem:[%s2 + $0x38] sm:$0xff]
        %325 = vset.pattern.permute.xlu0 0
        %326 = vperm.xlu0 %325, %v316
        %v327 = vpop.permute.xlu0 %326
        %330 = vset.pattern.permute.xlu0 0
        %331 = vperm.xlu0 %330, %v317
        %v332 = vpop.permute.xlu0 %331
        %335 = vset.pattern.permute.xlu0 0
        %336 = vperm.xlu0 %335, %v318
        %v337 = vpop.permute.xlu0 %336
        %340 = vset.pattern.permute.xlu0 0
        %341 = vperm.xlu0 %340, %v319
        %v342 = vpop.permute.xlu0 %341
        %345 = vset.pattern.permute.xlu0 0
        %346 = vperm.xlu0 %345, %v320
        %v347 = vpop.permute.xlu0 %346
        %350 = vset.pattern.permute.xlu0 0
        %351 = vperm.xlu0 %350, %v321
        %v352 = vpop.permute.xlu0 %351
        %355 = vset.pattern.permute.xlu0 0
        %356 = vperm.xlu0 %355, %v322
        %v357 = vpop.permute.xlu0 %356
        %360 = vset.pattern.permute.xlu0 0
        %361 = vperm.xlu0 %360, %v323
        %v362 = vpop.permute.xlu0 %361
        %v364 = vadd.f32 %v300, %v327
        %v365 = vadd.f32 %v301, %v327
        %v366 = vadd.f32 %v302, %v332
        %v367 = vadd.f32 %v303, %v332
        %v368 = vadd.f32 %v304, %v337
        %v369 = vadd.f32 %v305, %v337
        %v370 = vadd.f32 %v306, %v342
        %v371 = vadd.f32 %v307, %v342
        %v372 = vadd.f32 %v308, %v347
        %v373 = vadd.f32 %v309, %v347
        %v374 = vadd.f32 %v310, %v352
        %v375 = vadd.f32 %v311, %v352
        %v376 = vadd.f32 %v312, %v357
        %v377 = vadd.f32 %v313, %v357
        %v378 = vadd.f32 %v314, %v362
        %v379 = vadd.f32 %v315, %v362
        %v380 = vmax.f32 %v364, 0.0
        %v381 = vmax.f32 %v365, 0.0
        %v382 = vmax.f32 %v366, 0.0
        %v383 = vmax.f32 %v367, 0.0
        %v384 = vmax.f32 %v368, 0.0
        %v385 = vmax.f32 %v369, 0.0
        %v386 = vmax.f32 %v370, 0.0
        %v387 = vmax.f32 %v371, 0.0
        %v388 = vmax.f32 %v372, 0.0
        %v389 = vmax.f32 %v373, 0.0
        %v390 = vmax.f32 %v374, 0.0
        %v391 = vmax.f32 %v375, 0.0
        %v392 = vmax.f32 %v376, 0.0
        %v393 = vmax.f32 %v377, 0.0
        %v394 = vmax.f32 %v378, 0.0
        %v395 = vmax.f32 %v379, 0.0
        %v396 = vld [vmem:[%s3] sm:$0xff]
        %v397 = vld [vmem:[%s3 + $0x8] sm:$0xff]
        %v398 = vld [vmem:[%s3 + $0x10] sm:$0xff]
        %v399 = vld [vmem:[%s3 + $0x18] sm:$0xff]
        %v400 = vld [vmem:[%s3 + $0x20] sm:$0xff]
        %v401 = vld [vmem:[%s3 + $0x28] sm:$0xff]
        %v402 = vld [vmem:[%s3 + $0x30] sm:$0xff]
        %v403 = vld [vmem:[%s3 + $0x38] sm:$0xff]
        %vm404 = vcmask 523264
        %v406 = vsel %vm404, %v396, 0
        %v409 = vsel %vm404, %v397, 0
        %v412 = vsel %vm404, %v398, 0
        %v415 = vsel %vm404, %v399, 0
        %v418 = vsel %vm404, %v400, 0
        %v421 = vsel %vm404, %v401, 0
        %v424 = vsel %vm404, %v402, 0
        %v427 = vsel %vm404, %v403, 0
        %429 = vmatprep.subr.mxu0 0.0
        %430 = vmatpush1.msra.mxu0 0.0
        %431 = vmatprep.subr.mxu0 0.0
        %432 = vmatpush1.msra.mxu0 0.0
        %433 = vmatprep.subr.mxu0 0.0
        %434 = vmatpush1.msra.mxu0 0.0
        %435 = vmatprep.subr.mxu0 0.0
        %436 = vmatpush1.msra.mxu0 0.0
        %437 = vmatprep.subr.mxu0 0.0
        %438 = vmatpush1.msra.mxu0 0.0
        %439 = vmatprep.subr.mxu0 0.0
        %440 = vmatpush1.msra.mxu0 0.0
        %441 = vmatprep.subr.mxu0 0.0
        %442 = vmatpush1.msra.mxu0 0.0
        %443 = vmatprep.subr.mxu0 0.0
        %444 = vmatpush1.msra.mxu0 0.0
        %445 = vmatprep.subr.mxu0 %v395
        %446 = vmatpush1.msra.mxu0 %v394
        %447 = vmatprep.subr.mxu0 %v393
        %448 = vmatpush1.msra.mxu0 %v392
        %449 = vmatprep.subr.mxu0 %v391
        %450 = vmatpush1.msra.mxu0 %v390
        %451 = vmatprep.subr.mxu0 %v389
        %452 = vmatpush1.msra.mxu0 %v388
        %453 = vmatprep.subr.mxu0 %v387
        %454 = vmatpush1.msra.mxu0 %v386
        %455 = vmatprep.subr.mxu0 %v385
        %456 = vmatpush1.msra.mxu0 %v384
        %457 = vmatprep.subr.mxu0 %v383
        %458 = vmatpush1.msra.mxu0 %v382
        %459 = vmatprep.subr.mxu0 %v381
        %460 = vmatpush1.msra.mxu0 %v380
        %461 = vmatprep.subr.mxu0 0.0
        %462 = vmatpush2.msra.mxu0 0.0
        %463 = vmatprep.subr.mxu0 0.0
        %464 = vmatpush2.msra.mxu0 0.0
        %465 = vmatprep.subr.mxu0 0.0
        %466 = vmatpush2.msra.mxu0 0.0
        %467 = vmatprep.subr.mxu0 0.0
        %468 = vmatpush2.msra.mxu0 0.0
        %469 = vmatprep.subr.mxu0 0.0
        %470 = vmatpush2.msra.mxu0 0.0
        %471 = vmatprep.subr.mxu0 0.0
        %472 = vmatpush2.msra.mxu0 0.0
        %473 = vmatprep.subr.mxu0 0.0
        %474 = vmatpush2.msra.mxu0 0.0
        %475 = vmatprep.subr.mxu0 0.0
        %476 = vmatpush2.msra.mxu0 0.0
        %477 = vmatprep.subr.mxu0 0.0
        %478 = vmatpush2.msra.mxu0 0.0
        %479 = vmatprep.subr.mxu0 0.0
        %480 = vmatpush2.msra.mxu0 0.0
        %481 = vmatprep.subr.mxu0 0.0
        %482 = vmatpush2.msra.mxu0 0.0
        %483 = vmatprep.subr.mxu0 0.0
        %484 = vmatpush2.msra.mxu0 0.0
        %485 = vmatprep.subr.mxu0 0.0
        %486 = vmatpush2.msra.mxu0 0.0
        %487 = vmatprep.subr.mxu0 0.0
        %488 = vmatpush2.msra.mxu0 0.0
        %489 = vmatprep.subr.mxu0 0.0
        %490 = vmatpush2.msra.mxu0 0.0
        %491 = vmatprep.subr.mxu0 0.0
        %492 = vmatpush2.msra.mxu0 0.0
        %493 = vmatprep.mubr.f32.mxu0 0.0
        %494 = vmatmul.mubr.f32.gmra.mxu0 %v406
        %v495 = vpop.f32.mrf.mxu0
        %v496 = vadd.f32 0.0, %v495
        %v497 = vpop.f32.mrf.mxu0
        %v498 = vadd.f32 0.0, %v497
        %499 = vmatprep.mubr.f32.mxu0 0.0
        %500 = vmatmul.mubr.f32.gmra.mxu0 %v409
        %v501 = vpop.f32.mrf.mxu0
        %v502 = vadd.f32 0.0, %v501
        %v503 = vpop.f32.mrf.mxu0
        %v504 = vadd.f32 0.0, %v503
        %505 = vmatprep.mubr.f32.mxu0 0.0
        %506 = vmatmul.mubr.f32.gmra.mxu0 %v412
        %v507 = vpop.f32.mrf.mxu0
        %v508 = vadd.f32 0.0, %v507
        %v509 = vpop.f32.mrf.mxu0
        %v510 = vadd.f32 0.0, %v509
        %511 = vmatprep.mubr.f32.mxu0 0.0
        %512 = vmatmul.mubr.f32.gmra.mxu0 %v415
        %v513 = vpop.f32.mrf.mxu0
        %v514 = vadd.f32 0.0, %v513
        %v515 = vpop.f32.mrf.mxu0
        %v516 = vadd.f32 0.0, %v515
        %517 = vmatprep.mubr.f32.mxu0 0.0
        %518 = vmatmul.mubr.f32.gmra.mxu0 %v418
        %v519 = vpop.f32.mrf.mxu0
        %v520 = vadd.f32 0.0, %v519
        %v521 = vpop.f32.mrf.mxu0
        %v522 = vadd.f32 0.0, %v521
        %523 = vmatprep.mubr.f32.mxu0 0.0
        %524 = vmatmul.mubr.f32.gmra.mxu0 %v421
        %v525 = vpop.f32.mrf.mxu0
        %v526 = vadd.f32 0.0, %v525
        %v527 = vpop.f32.mrf.mxu0
        %v528 = vadd.f32 0.0, %v527
        %529 = vmatprep.mubr.f32.mxu0 0.0
        %530 = vmatmul.mubr.f32.gmra.mxu0 %v424
        %v531 = vpop.f32.mrf.mxu0
        %v532 = vadd.f32 0.0, %v531
        %v533 = vpop.f32.mrf.mxu0
        %v534 = vadd.f32 0.0, %v533
        %535 = vmatprep.mubr.f32.mxu0 0.0
        %536 = vmatmul.mubr.f32.gmra.mxu0 %v427
        %v537 = vpop.f32.mrf.mxu0
        %v538 = vadd.f32 0.0, %v537
        %v539 = vpop.f32.mrf.mxu0
        %v540 = vadd.f32 0.0, %v539
        %541 = vdwg.mxu0
        %542 = vst [vmem:[%s233] sm:$0xff] %v496
        %543 = vst [vmem:[%s233 + $0x8] sm:$0xff] %v498
        %544 = vst [vmem:[%s233 + $0x10] sm:$0xff] %v502
        %545 = vst [vmem:[%s233 + $0x18] sm:$0xff] %v504
        %546 = vst [vmem:[%s233 + $0x20] sm:$0xff] %v508
        %547 = vst [vmem:[%s233 + $0x28] sm:$0xff] %v510
        %548 = vst [vmem:[%s233 + $0x30] sm:$0xff] %v514
        %549 = vst [vmem:[%s233 + $0x38] sm:$0xff] %v516
        %550 = vst [vmem:[%s233 + $0x40] sm:$0xff] %v520
        %551 = vst [vmem:[%s233 + $0x48] sm:$0xff] %v522
        %552 = vst [vmem:[%s233 + $0x50] sm:$0xff] %v526
        %553 = vst [vmem:[%s233 + $0x58] sm:$0xff] %v528
        %554 = vst [vmem:[%s233 + $0x60] sm:$0xff] %v532
        %555 = vst [vmem:[%s233 + $0x68] sm:$0xff] %v534
        %556 = vst [vmem:[%s233 + $0x70] sm:$0xff] %v538
        %557 = vst [vmem:[%s233 + $0x78] sm:$0xff] %v540
        %s558 = sand.u32 %s134, 1
        %s559 = scalar_lea.sflag [#allocation4], %s558
        %s560 = sand.u32 %s134, 1
        %s561 = smul.addr %s560, 128
        %s562 = scalar_lea.vmem [#allocation5], %s561
        // Predicated region
        $region41: #{tpu_custom_call.1} parent=35 // pred_check
          %p563 = pneg %p144
        $region42: #{tpu_custom_call.1} parent=35 // pred_check_branch
          %565 = sbr.rel (%p563) target = $region44
        $region43: #{tpu_custom_call.1} parent=35 // pred_region
          %s566 = smul.u32 2, %s26
          %s568 = ssub.s32 2048, 2048
          %569 = vsyncadd %s559, %s568
          %s570 = smul.addr %s25, 16
          %s571 = sadd.s32 %s566, %s570
          %s572 = smul.addr %s571, 128
          %s573 = scalar_lea.hbm %s4, %s572
          %s574 = sshll.u32 %s562, 4
          %s575 = int_to_ptr.vmem [resolvable:$true] %s574
          %580 = dma.vmem_to_hbm [thread:$0]  %s575, 2048, %s573, %s559, 256, 256, 16
        $region44: #{tpu_custom_call.1} parent=35 // pred_fallthru
          _
      $region36: #{tpu_custom_call.1} parent=5 // pred_fallthru
        _
      %p581 = scmp.le.s32.totalorder 2, %s16
      // Predicated region
      $region45: #{tpu_custom_call.1} parent=5 // pred_check
        %p582 = pneg %p581
      $region46: #{tpu_custom_call.1} parent=5 // pred_check_branch
        %584 = sbr.rel (%p582) target = $region48
      $region47: #{tpu_custom_call.1} parent=5 // pred_region
        %s585 = ssub.s32 %s16, 2
        // Predicated region
        $region49: #{tpu_custom_call.1} parent=47 // pred_check
          %p586 = pneg %p150
        $region50: #{tpu_custom_call.1} parent=47 // pred_check_branch
          %588 = sbr.rel (%p586) target = $region52
        $region51: #{tpu_custom_call.1} parent=47 // pred_region
          %s589 = sand.u32 %s135, 1
          %s590 = scalar_lea.sflag [#allocation4], %s589
          %s591 = sand.u32 %s135, 1
          %s592 = smul.addr %s591, 128
          %s593 = scalar_lea.vmem [#allocation5], %s592
          %594 = dma.done %s590, 2048
        $region52: #{tpu_custom_call.1} parent=47 // pred_fallthru
          _
      $region48: #{tpu_custom_call.1} parent=5 // pred_fallthru
        _
    $region6: #{tpu_custom_call.1} parent=1 // loop_footer
      %s20 = sadd.s32 1, %s16
    $region7: #{tpu_custom_call.1} parent=1 // loop_footer_branch
      %15 = sbr.rel target = $region3
    $region8: #{tpu_custom_call.1} parent=1 // loop_exit
      _
    %595 = vsyncpa [#allocation3], 1
    %s596 = scalar_lea.sflag [#allocation3], 1
    %597 = vsyncpa %s596, 1
    %598 = vsyncpa [#allocation4], 1
    %s599 = scalar_lea.sflag [#allocation4], 1
    %600 = vsyncpa %s599, 1

</llo_original>
